<compile_context>
chip_gen: v7x
topology: tpu7x:2x2x1
jax: 0.10.0
libtpu: 0.0.40
codegen_flags: <defaults>
</compile_context>

<pallas_src>
import math

import jax
import jax.numpy as jnp
from jax.experimental import pallas as pl
from jax.experimental.pallas import tpu as pltpu

# ---- problem sizes (small, consistent with the module) ----
B = 2             # batch
N = 16            # set size (elements of X)
DIM = 32          # dim_Q = dim_K = dim_V
NUM_HEADS = 4
NUM_SEEDS = 8     # number of learned seed vectors
DIM_SPLIT = DIM // NUM_HEADS
HS = NUM_HEADS * NUM_SEEDS          # 32 packed (head, seed) rows

_SCALE = 1.0 / math.sqrt(DIM)       # Set Transformer scales by sqrt(dim_V)


def _pma_kernel(s_ref, x_ref, w_ref, b_ref, qmask_ref, sel_ref, o_ref):
    """Whole-batch-chunk PMA forward.

    s_ref     : (NUM_SEEDS, DIM)        learned seeds (shared across batch)
    x_ref     : (BB, N, DIM)            batch chunk of the input set
    w_ref     : (4, DIM, DIM)           [Wq.T, Wk, Wv.T, Wo.T]   (Wk kept in torch layout)
    b_ref     : (4, DIM)                [bq, bk, bv, bo]
    qmask_ref : (HS, DIM)               row (h*S+s), col f -> 1.0 iff f // DIM_SPLIT == h
    sel_ref   : (NUM_SEEDS, HS)         [s, h*S+s'] -> 1.0 iff s' == s (head-merge selector)
    o_ref     : (BB, NUM_SEEDS, DIM)
    """
    S_ = s_ref[...]                            # (S, DIM)
    X3 = x_ref[...]                            # (BB, N, DIM)
    bb = X3.shape[0]

    wq_t = w_ref[0]                            # (DIM, DIM) = Wq.T
    wk = w_ref[1]                              # (DIM, DIM) = Wk (rows = out features)
    wv_t = w_ref[2]                            # (DIM, DIM) = Wv.T
    wo_t = w_ref[3]                            # (DIM, DIM) = Wo.T
    bq = b_ref[0:1, :]
    bk = b_ref[1:2, :]
    bv = b_ref[2:3, :]
    bo = b_ref[3:4, :]
    qmask = qmask_ref[...]                     # (HS, DIM)
    sel = sel_ref[...]                         # (S, HS)

    # ---- projections (pre-transposed weights: y = x @ W) ----
    Qp = jnp.dot(S_, wq_t, preferred_element_type=jnp.float32) + bq         # (S, DIM)

    Xf = X3.reshape(bb * N, DIM)                                            # (BB*N, DIM)
    Vp = jnp.dot(Xf, wv_t, preferred_element_type=jnp.float32) + bv         # (BB*N, DIM)
    Vp = Vp.reshape(bb, N, DIM)                                             # (BB, N, DIM)

    # ---- heads packed along the row (sublane) axis ----
    # Qmask[(h,s), f] = Qp[s, f] on head h's feature block, 0 elsewhere.
    qmask3 = qmask.reshape(NUM_HEADS, NUM_SEEDS, DIM)                       # (H, S, DIM)
    Qmask = (qmask3 * Qp[None]).reshape(HS, DIM)                            # (HS, DIM)

    # Fold the K projection into the query side (K only ever appears in the logits):
    #   P[(h,s), i] = sum_d Qp[s, h*DS+d] * Wk[h*DS+d, i]
    P = jnp.dot(Qmask, wk, preferred_element_type=jnp.float32)              # (HS, DIM)
    # bk contribution (constant over keys; kept for exact parity with reference logits)
    qb = jnp.sum(Qmask * bk, axis=-1, keepdims=True)                        # (HS, 1)

    # logits[b, (h,s), n] = sum_i P[(h,s), i] * X[b, n, i]   (flash-style batched einsum)
    Pb = jnp.broadcast_to(P[None], (bb, HS, DIM))                           # (BB, HS, DIM)
    logits = (jnp.einsum('bri,bni->brn', Pb, X3,
                         preferred_element_type=jnp.float32) + qb) * _SCALE  # (BB, HS, N)

    # softmax over keys (last / lane axis)
    m = jnp.max(logits, axis=-1, keepdims=True)
    e = jnp.exp(logits - m)
    A = e * pl.reciprocal(jnp.sum(e, axis=-1, keepdims=True), approx=True)  # (BB, HS, N)

    # context of every (head, seed) row against the full V feature dim ...
    ctx = jnp.einsum('brn,bnf->brf', A, Vp,
                     preferred_element_type=jnp.float32)                    # (BB, HS, DIM)
    # ... masked to the head's own feature block and merged back to (BB, S, DIM)
    # with a constant seed-selector matmul (no per-head slicing / concatenation).
    ctx = ctx * qmask[None]
    selb = jnp.broadcast_to(sel[None], (bb, NUM_SEEDS, HS))                 # (BB, S, HS)
    O_att = jnp.einsum('bsr,brf->bsf', selb, ctx,
                       preferred_element_type=jnp.float32)                  # (BB, S, DIM)

    O = Qp[None] + O_att                                                    # (BB, S, DIM)

    # output MLP + ReLU residual (single 2-D matmul over all BB*S rows)
    O2 = O.reshape(bb * NUM_SEEDS, DIM)
    ff = jnp.dot(O2, wo_t, preferred_element_type=jnp.float32) + bo
    out2 = O2 + jnp.maximum(ff, 0.0)
    o_ref[...] = out2.reshape(bb, NUM_SEEDS, DIM)


def _prep_constants(params):
    """Wrapper-side (constant-foldable) weight re-layout."""
    S, Wq, bq, Wk, bk, Wv, bv, Wo, bo = params
    W_all = jnp.stack([Wq.T, Wk, Wv.T, Wo.T], axis=0)                       # (4, DIM, DIM)
    B_all = jnp.stack([bq, bk, bv, bo], axis=0)                             # (4, DIM)
    head_eye = jnp.repeat(jnp.eye(NUM_HEADS, dtype=jnp.float32),
                          DIM_SPLIT, axis=1)                                # (H, DIM)
    QMASK = jnp.repeat(head_eye, NUM_SEEDS, axis=0)                         # (HS, DIM)
    SEL = jnp.tile(jnp.eye(NUM_SEEDS, dtype=jnp.float32), (1, NUM_HEADS))   # (S, HS)
    return S, W_all, B_all, QMASK, SEL


def pma_forward(X, params, batch_block=None):
    """X: (B, N, DIM) float32 -> (B, NUM_SEEDS, DIM) float32.

    batch_block: rows of the batch handled per grid step.  Default = whole batch
    (grid=(1,), best on v5e/v6e single-TC chips).  On v7x set batch_block = B // 2
    so the two TensorCores each take one "parallel" step.
    """
    Bsz = X.shape[0]
    if Bsz == 0:
        # Mirrors the `Q.size(0) == 0` early return in MAB.forward.
        return jnp.zeros((0, NUM_SEEDS, DIM), X.dtype)

    S, W_all, B_all, QMASK, SEL = _prep_constants(params)

    bb = Bsz if batch_block is None else batch_block
    assert Bsz % bb == 0, "batch_block must divide the batch size"
    grid = (pl.cdiv(Bsz, bb),)

    const2d = lambda shape: pl.BlockSpec(shape, lambda b: (0, 0))

    return pl.pallas_call(
        _pma_kernel,
        out_shape=jax.ShapeDtypeStruct((Bsz, NUM_SEEDS, DIM), jnp.float32),
        grid_spec=pltpu.PrefetchScalarGridSpec(
            num_scalar_prefetch=0,
            grid=grid,
            in_specs=[
                const2d((NUM_SEEDS, DIM)),                              # S (seeds)
                pl.BlockSpec((bb, N, DIM), lambda b: (b, 0, 0)),        # X batch chunk
                pl.BlockSpec((4, DIM, DIM), lambda b: (0, 0, 0)),       # stacked weights
                const2d((4, DIM)),                                      # stacked biases
                const2d((HS, DIM)),                                     # head mask
                const2d((NUM_SEEDS, HS)),                               # seed selector
            ],
            out_specs=pl.BlockSpec((bb, NUM_SEEDS, DIM), lambda b: (b, 0, 0)),
        ),
        compiler_params=pltpu.CompilerParams(dimension_semantics=("parallel",)),
    )(S, X, W_all, B_all, QMASK, SEL)


def init_params(key):
    """Deterministic synthetic parameters (shapes match PMA.__init__)."""
    ks = jax.random.split(key, 9)
    # S: (1, num_seeds, dim) in torch; stored squeezed as (num_seeds, dim)
    xav = math.sqrt(6.0 / (NUM_SEEDS + DIM))
    S = jax.random.uniform(ks[0], (NUM_SEEDS, DIM), jnp.float32, -xav, xav)
    lim = 1.0 / math.sqrt(DIM)
    lin = lambda k, shape: jax.random.uniform(k, shape, jnp.float32, -lim, lim)
    Wq, bq = lin(ks[1], (DIM, DIM)), lin(ks[2], (DIM,))
    Wk, bk = lin(ks[3], (DIM, DIM)), lin(ks[4], (DIM,))
    Wv, bv = lin(ks[5], (DIM, DIM)), lin(ks[6], (DIM,))
    Wo, bo = lin(ks[7], (DIM, DIM)), lin(ks[8], (DIM,))
    return (S, Wq, bq, Wk, bk, Wv, bv, Wo, bo)


def pma_reference(X, params):
    """Pure-JAX reference mirroring the PyTorch MAB/PMA forward exactly."""
    S, Wq, bq, Wk, bk, Wv, bv, Wo, bo = params
    Bb = X.shape[0]
    Q = jnp.broadcast_to(S[None], (Bb, NUM_SEEDS, DIM))
    Qp = Q @ Wq.T + bq
    Kp = X @ Wk.T + bk
    Vp = X @ Wv.T + bv
    # torch.cat(t.split(dim_split, 2), 0): head-major stacking along batch
    split = lambda T: jnp.concatenate(jnp.split(T, NUM_HEADS, axis=2), axis=0)
    Q_, K_, V_ = split(Qp), split(Kp), split(Vp)
    A = jax.nn.softmax(jnp.einsum('bsd,bnd->bsn', Q_, K_) / math.sqrt(DIM), axis=2)
    O_ = Q_ + jnp.einsum('bsn,bnd->bsd', A, V_)
    O = jnp.concatenate(jnp.split(O_, NUM_HEADS, axis=0), axis=2)   # (B, num_seeds, dim)
    return O + jax.nn.relu(O @ Wo.T + bo)


if __name__ == "__main__":
    key = jax.random.PRNGKey(0)
    pkey, xkey = jax.random.split(key)
    params = init_params(pkey)
    X = jax.random.normal(xkey, (B, N, DIM), jnp.float32)

    out = jax.jit(pma_forward)(X, params)
    out = jax.block_until_ready(out)

    ref = pma_reference(X, params)
    assert out.shape == (B, NUM_SEEDS, DIM)
    # Tolerance relaxed to 2e-3: approximate EUP reciprocal in the softmax denominator.
    assert jnp.allclose(out, ref, atol=2e-3, rtol=2e-3), (
        f"mismatch vs. reference, max abs err = {jnp.max(jnp.abs(out - ref))}")

    print("KERNEL_OK")
</pallas_src>

<mosaic_0001>
module attributes {stable_mosaic.version = 11 : i64} {
  func.func @_pma_kernel(%arg0: i32, %arg1: memref<8x32xf32, #tpu.memory_space<vmem>>, %arg2: memref<2x16x32xf32, #tpu.memory_space<vmem>>, %arg3: memref<4x32x32xf32, #tpu.memory_space<vmem>>, %arg4: memref<4x32xf32, #tpu.memory_space<vmem>>, %arg5: memref<32x32xf32, #tpu.memory_space<vmem>>, %arg6: memref<8x32xf32, #tpu.memory_space<vmem>>, %arg7: memref<2x8x32xf32, #tpu.memory_space<vmem>>) attributes {dimension_semantics = [#tpu.dimension_semantics<parallel>], iteration_bounds = array<i64: 1>, scalar_prefetch = 0 : i64, scratch_operands = 0 : i64, tpu.core_type = #tpu.core_type<tc>, window_params = [{pipeline_mode = #tpu.pipeline_mode<synchronous>, transform_indices = @transform_0, window_bounds = array<i64: 8, 32>}, {transform_indices = @transform_1, window_bounds = array<i64: 2, 16, 32>}, {pipeline_mode = #tpu.pipeline_mode<synchronous>, transform_indices = @transform_2, window_bounds = array<i64: 4, 32, 32>}, {pipeline_mode = #tpu.pipeline_mode<synchronous>, transform_indices = @transform_3, window_bounds = array<i64: 4, 32>}, {pipeline_mode = #tpu.pipeline_mode<synchronous>, transform_indices = @transform_4, window_bounds = array<i64: 32, 32>}, {pipeline_mode = #tpu.pipeline_mode<synchronous>, transform_indices = @transform_5, window_bounds = array<i64: 8, 32>}, {transform_indices = @transform_6, window_bounds = array<i64: 2, 8, 32>}]} {
    %c0 = arith.constant 0 : index
    %c0_0 = arith.constant 0 : index
    %0 = vector.load %arg1[%c0, %c0_0] : memref<8x32xf32, #tpu.memory_space<vmem>>, vector<8x32xf32>
    %c0_1 = arith.constant 0 : index
    %c0_2 = arith.constant 0 : index
    %c0_3 = arith.constant 0 : index
    %1 = vector.load %arg2[%c0_1, %c0_2, %c0_3] : memref<2x16x32xf32, #tpu.memory_space<vmem>>, vector<2x16x32xf32>
    %c0_4 = arith.constant 0 : index
    %c0_5 = arith.constant 0 : index
    %c0_6 = arith.constant 0 : index
    %2 = vector.load %arg3[%c0_4, %c0_5, %c0_6] : memref<4x32x32xf32, #tpu.memory_space<vmem>>, vector<1x32x32xf32>
    %3 = vector.shape_cast %2 : vector<1x32x32xf32> to vector<32x32xf32>
    %c1 = arith.constant 1 : index
    %c0_7 = arith.constant 0 : index
    %c0_8 = arith.constant 0 : index
    %4 = vector.load %arg3[%c1, %c0_7, %c0_8] : memref<4x32x32xf32, #tpu.memory_space<vmem>>, vector<1x32x32xf32>
    %5 = vector.shape_cast %4 : vector<1x32x32xf32> to vector<32x32xf32>
    %c2 = arith.constant 2 : index
    %c0_9 = arith.constant 0 : index
    %c0_10 = arith.constant 0 : index
    %6 = vector.load %arg3[%c2, %c0_9, %c0_10] : memref<4x32x32xf32, #tpu.memory_space<vmem>>, vector<1x32x32xf32>
    %7 = vector.shape_cast %6 : vector<1x32x32xf32> to vector<32x32xf32>
    %c3 = arith.constant 3 : index
    %c0_11 = arith.constant 0 : index
    %c0_12 = arith.constant 0 : index
    %8 = vector.load %arg3[%c3, %c0_11, %c0_12] : memref<4x32x32xf32, #tpu.memory_space<vmem>>, vector<1x32x32xf32>
    %9 = vector.shape_cast %8 : vector<1x32x32xf32> to vector<32x32xf32>
    %c0_13 = arith.constant 0 : index
    %c0_14 = arith.constant 0 : index
    %10 = vector.load %arg4[%c0_13, %c0_14] : memref<4x32xf32, #tpu.memory_space<vmem>>, vector<1x32xf32>
    %c1_15 = arith.constant 1 : index
    %c0_16 = arith.constant 0 : index
    %11 = vector.load %arg4[%c1_15, %c0_16] : memref<4x32xf32, #tpu.memory_space<vmem>>, vector<1x32xf32>
    %c2_17 = arith.constant 2 : index
    %c0_18 = arith.constant 0 : index
    %12 = vector.load %arg4[%c2_17, %c0_18] : memref<4x32xf32, #tpu.memory_space<vmem>>, vector<1x32xf32>
    %c3_19 = arith.constant 3 : index
    %c0_20 = arith.constant 0 : index
    %13 = vector.load %arg4[%c3_19, %c0_20] : memref<4x32xf32, #tpu.memory_space<vmem>>, vector<1x32xf32>
    %c0_21 = arith.constant 0 : index
    %c0_22 = arith.constant 0 : index
    %14 = vector.load %arg5[%c0_21, %c0_22] : memref<32x32xf32, #tpu.memory_space<vmem>>, vector<32x32xf32>
    %c0_23 = arith.constant 0 : index
    %c0_24 = arith.constant 0 : index
    %15 = vector.load %arg6[%c0_23, %c0_24] : memref<8x32xf32, #tpu.memory_space<vmem>>, vector<8x32xf32>
    %cst = arith.constant dense<0.000000e+00> : vector<8x32xf32>
    %16 = tpu.matmul %0, %3, %cst {dimension_numbers = #tpu.dot_dimension_numbers<[1], [0], [0], [1], [0, 0, 1, 1], [], []>} : vector<8x32xf32>, vector<32x32xf32>, vector<8x32xf32> -> vector<8x32xf32>
    %17 = vector.broadcast %10 : vector<1x32xf32> to vector<8x32xf32>
    %18 = arith.addf %16, %17 : vector<8x32xf32>
    %19 = vector.shape_cast %1 : vector<2x16x32xf32> to vector<32x32xf32>
    %cst_25 = arith.constant dense<0.000000e+00> : vector<32x32xf32>
    %20 = tpu.matmul %19, %7, %cst_25 {dimension_numbers = #tpu.dot_dimension_numbers<[1], [0], [0], [1], [0, 0, 1, 1], [], []>} : vector<32x32xf32>, vector<32x32xf32>, vector<32x32xf32> -> vector<32x32xf32>
    %21 = vector.broadcast %12 : vector<1x32xf32> to vector<32x32xf32>
    %22 = arith.addf %20, %21 : vector<32x32xf32>
    %23 = vector.shape_cast %22 : vector<32x32xf32> to vector<2x16x32xf32>
    %24 = vector.shape_cast %14 : vector<32x32xf32> to vector<4x8x32xf32>
    %25 = vector.shape_cast %18 : vector<8x32xf32> to vector<1x8x32xf32>
    %26 = vector.broadcast %25 : vector<1x8x32xf32> to vector<4x8x32xf32>
    %27 = arith.mulf %24, %26 : vector<4x8x32xf32>
    %28 = vector.shape_cast %27 : vector<4x8x32xf32> to vector<32x32xf32>
    %cst_26 = arith.constant dense<0.000000e+00> : vector<32x32xf32>
    %29 = tpu.matmul %28, %5, %cst_26 {dimension_numbers = #tpu.dot_dimension_numbers<[1], [0], [0], [1], [0, 0, 1, 1], [], []>} : vector<32x32xf32>, vector<32x32xf32>, vector<32x32xf32> -> vector<32x32xf32>
    %30 = vector.broadcast %11 : vector<1x32xf32> to vector<32x32xf32>
    %31 = arith.mulf %28, %30 : vector<32x32xf32>
    %cst_27 = arith.constant dense<0.000000e+00> : vector<32xf32>
    %32 = vector.multi_reduction <add>, %31, %cst_27 [1] : vector<32x32xf32> to vector<32xf32>
    %33 = vector.shape_cast %32 : vector<32xf32> to vector<32x1xf32>
    %34 = vector.shape_cast %29 : vector<32x32xf32> to vector<1x32x32xf32>
    %35 = vector.shape_cast %34 : vector<1x32x32xf32> to vector<1x32x32xf32>
    %36 = vector.broadcast %35 : vector<1x32x32xf32> to vector<2x32x32xf32>
    "tpu.trace_start"() <{level = 10 : i32, message = "bri,bni->brn"}> : () -> ()
    %cst_28 = arith.constant dense<0.000000e+00> : vector<2x32x16xf32>
    %37 = tpu.matmul %36, %1, %cst_28 {dimension_numbers = #tpu.dot_dimension_numbers<[2], [2], [1], [1], [0, 0, 0, 1, 1, 1], [0], [0]>} : vector<2x32x32xf32>, vector<2x16x32xf32>, vector<2x32x16xf32> -> vector<2x32x16xf32>
    "tpu.trace_stop"() : () -> ()
    %38 = vector.shape_cast %33 : vector<32x1xf32> to vector<1x32x1xf32>
    %39 = vector.broadcast %38 : vector<1x32x1xf32> to vector<2x32x16xf32>
    %40 = arith.addf %37, %39 : vector<2x32x16xf32>
    %cst_29 = arith.constant 0.176776692 : f32
    %41 = vector.broadcast %cst_29 : f32 to vector<2x32x16xf32>
    %42 = arith.mulf %40, %41 : vector<2x32x16xf32>
    %cst_30 = arith.constant dense<0xFF800000> : vector<2x32xf32>
    %43 = vector.multi_reduction <maximumf>, %42, %cst_30 [2] : vector<2x32x16xf32> to vector<2x32xf32>
    %44 = vector.shape_cast %43 : vector<2x32xf32> to vector<2x32x1xf32>
    %45 = vector.broadcast %44 : vector<2x32x1xf32> to vector<2x32x16xf32>
    %46 = arith.subf %42, %45 : vector<2x32x16xf32>
    %47 = math.exp %46 : vector<2x32x16xf32>
    %cst_31 = arith.constant dense<0.000000e+00> : vector<2x32xf32>
    %48 = vector.multi_reduction <add>, %47, %cst_31 [2] : vector<2x32x16xf32> to vector<2x32xf32>
    %49 = vector.shape_cast %48 : vector<2x32xf32> to vector<2x32x1xf32>
    %50 = tpu.reciprocal %49 {approx = true} : vector<2x32x1xf32> -> vector<2x32x1xf32>
    %51 = vector.broadcast %50 : vector<2x32x1xf32> to vector<2x32x16xf32>
    %52 = arith.mulf %47, %51 : vector<2x32x16xf32>
    "tpu.trace_start"() <{level = 10 : i32, message = "brn,bnf->brf"}> : () -> ()
    %cst_32 = arith.constant dense<0.000000e+00> : vector<2x32x32xf32>
    %53 = tpu.matmul %52, %23, %cst_32 {dimension_numbers = #tpu.dot_dimension_numbers<[2], [1], [1], [2], [0, 0, 0, 1, 1, 2], [0], [0]>} : vector<2x32x16xf32>, vector<2x16x32xf32>, vector<2x32x32xf32> -> vector<2x32x32xf32>
    "tpu.trace_stop"() : () -> ()
    %54 = vector.shape_cast %14 : vector<32x32xf32> to vector<1x32x32xf32>
    %55 = vector.broadcast %54 : vector<1x32x32xf32> to vector<2x32x32xf32>
    %56 = arith.mulf %53, %55 : vector<2x32x32xf32>
    %57 = vector.shape_cast %15 : vector<8x32xf32> to vector<1x8x32xf32>
    %58 = vector.shape_cast %57 : vector<1x8x32xf32> to vector<1x8x32xf32>
    %59 = vector.broadcast %58 : vector<1x8x32xf32> to vector<2x8x32xf32>
    "tpu.trace_start"() <{level = 10 : i32, message = "bsr,brf->bsf"}> : () -> ()
    %cst_33 = arith.constant dense<0.000000e+00> : vector<2x8x32xf32>
    %60 = tpu.matmul %59, %56, %cst_33 {dimension_numbers = #tpu.dot_dimension_numbers<[2], [1], [1], [2], [0, 0, 0, 1, 1, 2], [0], [0]>} : vector<2x8x32xf32>, vector<2x32x32xf32>, vector<2x8x32xf32> -> vector<2x8x32xf32>
    "tpu.trace_stop"() : () -> ()
    %61 = vector.shape_cast %18 : vector<8x32xf32> to vector<1x8x32xf32>
    %62 = vector.broadcast %61 : vector<1x8x32xf32> to vector<2x8x32xf32>
    %63 = arith.addf %62, %60 : vector<2x8x32xf32>
    %64 = vector.shape_cast %63 : vector<2x8x32xf32> to vector<16x32xf32>
    %cst_34 = arith.constant dense<0.000000e+00> : vector<16x32xf32>
    %65 = tpu.matmul %64, %9, %cst_34 {dimension_numbers = #tpu.dot_dimension_numbers<[1], [0], [0], [1], [0, 0, 1, 1], [], []>} : vector<16x32xf32>, vector<32x32xf32>, vector<16x32xf32> -> vector<16x32xf32>
    %66 = vector.broadcast %13 : vector<1x32xf32> to vector<16x32xf32>
    %67 = arith.addf %65, %66 : vector<16x32xf32>
    %cst_35 = arith.constant 0.000000e+00 : f32
    %68 = vector.broadcast %cst_35 : f32 to vector<16x32xf32>
    %69 = arith.maximumf %67, %68 : vector<16x32xf32>
    %70 = arith.addf %64, %69 : vector<16x32xf32>
    %71 = vector.shape_cast %70 : vector<16x32xf32> to vector<2x8x32xf32>
    %c0_36 = arith.constant 0 : index
    %c0_37 = arith.constant 0 : index
    %c0_38 = arith.constant 0 : index
    %72 = vector.load %arg7[%c0_36, %c0_37, %c0_38] : memref<2x8x32xf32, #tpu.memory_space<vmem>>, vector<2x8x32xf32>
    tpu.vector_store %arg7[%c0_36, %c0_37, %c0_38], %71 {strides = array<i32>} : memref<2x8x32xf32, #tpu.memory_space<vmem>>, vector<2x8x32xf32>,
    return
  }
  func.func @transform_0(%arg0: i32) -> (i32, i32) {
    %c0_i32 = arith.constant 0 : i32
    %c0_i32_0 = arith.constant 0 : i32
    %c0_i32_1 = arith.constant 0 : i32
    return %c0_i32, %c0_i32_0 : i32, i32
  }
  func.func @transform_1(%arg0: i32) -> (i32, i32, i32) {
    %c0_i32 = arith.constant 0 : i32
    %c0_i32_0 = arith.constant 0 : i32
    %c0_i32_1 = arith.constant 0 : i32
    return %arg0, %c0_i32, %c0_i32_0 : i32, i32, i32
  }
  func.func @transform_2(%arg0: i32) -> (i32, i32, i32) {
    %c0_i32 = arith.constant 0 : i32
    %c0_i32_0 = arith.constant 0 : i32
    %c0_i32_1 = arith.constant 0 : i32
    %c0_i32_2 = arith.constant 0 : i32
    return %c0_i32, %c0_i32_0, %c0_i32_1 : i32, i32, i32
  }
  func.func @transform_3(%arg0: i32) -> (i32, i32) {
    %c0_i32 = arith.constant 0 : i32
    %c0_i32_0 = arith.constant 0 : i32
    %c0_i32_1 = arith.constant 0 : i32
    return %c0_i32, %c0_i32_0 : i32, i32
  }
  func.func @transform_4(%arg0: i32) -> (i32, i32) {
    %c0_i32 = arith.constant 0 : i32
    %c0_i32_0 = arith.constant 0 : i32
    %c0_i32_1 = arith.constant 0 : i32
    return %c0_i32, %c0_i32_0 : i32, i32
  }
  func.func @transform_5(%arg0: i32) -> (i32, i32) {
    %c0_i32 = arith.constant 0 : i32
    %c0_i32_0 = arith.constant 0 : i32
    %c0_i32_1 = arith.constant 0 : i32
    return %c0_i32, %c0_i32_0 : i32, i32
  }
  func.func @transform_6(%arg0: i32) -> (i32, i32, i32) {
    %c0_i32 = arith.constant 0 : i32
    %c0_i32_0 = arith.constant 0 : i32
    %c0_i32_1 = arith.constant 0 : i32
    return %arg0, %c0_i32, %c0_i32_0 : i32, i32, i32
  }
}

</mosaic_0001>

<llo_original>
// kernel: tile.9
$region0: #{tile.9}
  %s0 = inlined_call_operand.vmem [shape: f32[8,4,8], index: 0, kind: input, shape index: {}]
  %s1 = inlined_call_operand.vmem [shape: f32[8,32], index: 1, kind: output, shape index: {}]
  $region1: #{tile.9} parent=0
    #allocation0 [shape = 'u8[32768]{0}', space=vmem, size = 0x8000, scoped, tag = 'scoped mem for input reshape']
    %s3 = sshllo.u32 0, 4
    %s4 = smul.addr 4, 7
    %s5 = scalar_lea.vmem %s0, %s4
    %v6 = vld [vmem:[%s5] sm:%s3]
    %s7 = scalar_lea.vmem [#allocation0], 56
    %8 = vst [vmem:[%s7] sm:%s3] %v6
    %s9 = smul.addr 4, 6
    %s10 = scalar_lea.vmem %s0, %s9
    %v11 = vld [vmem:[%s10] sm:%s3]
    %s12 = scalar_lea.vmem [#allocation0], 48
    %13 = vst [vmem:[%s12] sm:%s3] %v11
    %s14 = smul.addr 4, 5
    %s15 = scalar_lea.vmem %s0, %s14
    %v16 = vld [vmem:[%s15] sm:%s3]
    %s17 = scalar_lea.vmem [#allocation0], 40
    %18 = vst [vmem:[%s17] sm:%s3] %v16
    %s19 = smul.addr 4, 4
    %s20 = scalar_lea.vmem %s0, %s19
    %v21 = vld [vmem:[%s20] sm:%s3]
    %s22 = scalar_lea.vmem [#allocation0], 32
    %23 = vst [vmem:[%s22] sm:%s3] %v21
    %s24 = smul.addr 4, 3
    %s25 = scalar_lea.vmem %s0, %s24
    %v26 = vld [vmem:[%s25] sm:%s3]
    %s27 = scalar_lea.vmem [#allocation0], 24
    %28 = vst [vmem:[%s27] sm:%s3] %v26
    %s29 = smul.addr 4, 2
    %s30 = scalar_lea.vmem %s0, %s29
    %v31 = vld [vmem:[%s30] sm:%s3]
    %s32 = scalar_lea.vmem [#allocation0], 16
    %33 = vst [vmem:[%s32] sm:%s3] %v31
    %s34 = scalar_lea.vmem %s0, 4
    %v35 = vld [vmem:[%s34] sm:%s3]
    %s36 = scalar_lea.vmem [#allocation0], 8
    %37 = vst [vmem:[%s36] sm:%s3] %v35
    %v38 = vld [vmem:[%s0] sm:%s3]
    %39 = vst [vmem:[#allocation0] sm:%s3] %v38
    %v40 = vld [vmem:[#allocation0] ss:$8 sm:$0xf]
    %v41 = vld [vmem:[#allocation0] ss:$8 sm:$0xf0]
    %vm42 = vcmask 1047556
    %v43 = vsel %vm42, %v41, %v40
    %vm44 = vcmask 64512
    %45 = vst.msk [vmem:[%s1] sm:$0xff] %vm44, %v43
    %s46 = scalar_lea.vmem [#allocation0], 3
    %v47 = vld [vmem:[%s46] ss:$8 sm:$0xf]
    %s48 = scalar_lea.vmem [#allocation0], 3
    %v49 = vld [vmem:[%s48] ss:$8 sm:$0xf0]
    %vm50 = vcmask 1047556
    %v51 = vsel %vm50, %v49, %v47
    %52 = vrot.lane.b32.xlu0 %v51, 24
    %v53 = vpop.permute.xlu0 %52
    %vm54 = vcmask 261312
    %55 = vst.msk [vmem:[%s1] sm:$0xff] %vm54, %v53
    %s56 = scalar_lea.vmem [#allocation0], 2
    %v57 = vld [vmem:[%s56] ss:$8 sm:$0xf]
    %s58 = scalar_lea.vmem [#allocation0], 2
    %v59 = vld [vmem:[%s58] ss:$8 sm:$0xf0]
    %vm60 = vcmask 1047556
    %v61 = vsel %vm60, %v59, %v57
    %62 = vrot.lane.b32.xlu0 %v61, 16
    %v63 = vpop.permute.xlu0 %62
    %vm64 = vcmask 195712
    %65 = vst.msk [vmem:[%s1] sm:$0xff] %vm64, %v63
    %s66 = scalar_lea.vmem [#allocation0], 1
    %v67 = vld [vmem:[%s66] ss:$8 sm:$0xf]
    %s68 = scalar_lea.vmem [#allocation0], 1
    %v69 = vld [vmem:[%s68] ss:$8 sm:$0xf0]
    %vm70 = vcmask 1047556
    %v71 = vsel %vm70, %v69, %v67
    %72 = vrot.lane.b32.xlu0 %v71, 8
    %v73 = vpop.permute.xlu0 %72
    %vm74 = vcmask 130112
    %75 = vst.msk [vmem:[%s1] sm:$0xff] %vm74, %v73

// kernel: pma_forward.1
$region0: #{pma_forward.1}
  #allocation0 [shape = 'u32[]', space=smem, size = 0x4, offset = 0x4, fixed_abs, tag = 'smem constant byte address 0x4 - core index']
  #allocation1 [shape = 'u32[144,128]{1,0:T(1,128)}', space=vmem, size = 0x12000, scoped, tag = 'internal scratch']
  %s0 = inlined_call_operand.vmem [shape: f32[8,32], index: 0, kind: input, shape index: {}]
  %s1 = inlined_call_operand.vmem [shape: f32[2,16,32], index: 1, kind: input, shape index: {}]
  %s2 = inlined_call_operand.vmem [shape: f32[4,32,32], index: 2, kind: input, shape index: {}]
  %s3 = inlined_call_operand.vmem [shape: f32[4,32], index: 3, kind: input, shape index: {}]
  %s4 = inlined_call_operand.vmem [shape: f32[32,32], index: 4, kind: input, shape index: {}]
  %s5 = inlined_call_operand.vmem [shape: f32[8,32], index: 5, kind: input, shape index: {}]
  %s6 = inlined_call_operand.hbm [shape: f32[2,8,32], index: 6, kind: output, shape index: {}]
  %s7 = sld [smem:[#allocation0]]
  $region34: #{pma_forward.1} parent=0
    _
  %s9 = ssub.s32 1, %s7
  %s10 = scalar_select 0, %s9, %s7
  $region1: #{pma_forward.1} parent=0
    #allocation2 [shape = 'u8[8192]{0}', space=vmem, size = 0x2000, scoped, tag = 'output window, operand 0, single buffered']
    #allocation3 [shape = 's32[1]{0}', space=sflag, size = 0x4, scoped, tag = 'scoped memory for pma_forward.1']
    %11 = vsyncpa [#allocation3], 0
    // Predicated region
    $region2: #{pma_forward.1} parent=1 // pred_check
      _
    $region3: #{pma_forward.1} parent=1 // pred_check_branch
      %13 = sbr.rel (0) target = $region5
    $region4: #{pma_forward.1} parent=1 // pred_region
      _
    $region5: #{pma_forward.1} parent=1 // pred_fallthru
      _
    // Predicated region
    $region6: #{pma_forward.1} parent=1 // pred_check
      _
    $region7: #{pma_forward.1} parent=1 // pred_check_branch
      %15 = sbr.rel (0) target = $region9
    $region8: #{pma_forward.1} parent=1 // pred_region
      _
    $region9: #{pma_forward.1} parent=1 // pred_fallthru
      _
    // Predicated region
    $region10: #{pma_forward.1} parent=1 // pred_check
      _
    $region11: #{pma_forward.1} parent=1 // pred_check_branch
      %17 = sbr.rel (0) target = $region13
    $region12: #{pma_forward.1} parent=1 // pred_region
      _
    $region13: #{pma_forward.1} parent=1 // pred_fallthru
      _
    // Predicated region
    $region14: #{pma_forward.1} parent=1 // pred_check
      _
    $region15: #{pma_forward.1} parent=1 // pred_check_branch
      %19 = sbr.rel (0) target = $region17
    $region16: #{pma_forward.1} parent=1 // pred_region
      _
    $region17: #{pma_forward.1} parent=1 // pred_fallthru
      _
    // Predicated region
    $region18: #{pma_forward.1} parent=1 // pred_check
      _
    $region19: #{pma_forward.1} parent=1 // pred_check_branch
      %21 = sbr.rel (0) target = $region21
    $region20: #{pma_forward.1} parent=1 // pred_region
      _
    $region21: #{pma_forward.1} parent=1 // pred_fallthru
      _
    // Predicated region
    $region22: #{pma_forward.1} parent=1 // pred_check
      _
    $region23: #{pma_forward.1} parent=1 // pred_check_branch
      %23 = sbr.rel (0) target = $region25
    $region24: #{pma_forward.1} parent=1 // pred_region
      _
    $region25: #{pma_forward.1} parent=1 // pred_fallthru
      _
    %v24 = vld [vmem:[%s0] sm:$0xff]
    %v25 = vld [vmem:[%s1] sm:$0xff]
    %v26 = vld [vmem:[%s1 + $0x8] sm:$0xff]
    %v27 = vld [vmem:[%s1 + $0x10] sm:$0xff]
    %v28 = vld [vmem:[%s1 + $0x18] sm:$0xff]
    %v29 = vld [vmem:[%s2] sm:$0xff]
    %v30 = vld [vmem:[%s2 + $0x8] sm:$0xff]
    %v31 = vld [vmem:[%s2 + $0x10] sm:$0xff]
    %v32 = vld [vmem:[%s2 + $0x18] sm:$0xff]
    %s33 = scalar_lea.vmem %s2, 32
    %v34 = vld [vmem:[%s33] sm:$0xff]
    %v35 = vld [vmem:[%s33 + $0x8] sm:$0xff]
    %v36 = vld [vmem:[%s33 + $0x10] sm:$0xff]
    %v37 = vld [vmem:[%s33 + $0x18] sm:$0xff]
    %s38 = scalar_lea.vmem %s2, 64
    %v39 = vld [vmem:[%s38] sm:$0xff]
    %v40 = vld [vmem:[%s38 + $0x8] sm:$0xff]
    %v41 = vld [vmem:[%s38 + $0x10] sm:$0xff]
    %v42 = vld [vmem:[%s38 + $0x18] sm:$0xff]
    %s43 = scalar_lea.vmem %s2, 96
    %v44 = vld [vmem:[%s43] sm:$0xff]
    %v45 = vld [vmem:[%s43 + $0x8] sm:$0xff]
    %v46 = vld [vmem:[%s43 + $0x10] sm:$0xff]
    %v47 = vld [vmem:[%s43 + $0x18] sm:$0xff]
    %v48 = vld [vmem:[%s3] sm:$0x1]
    %v49 = vld [vmem:[%s3 + $0x1] sm:$0x1]
    %v50 = vld [vmem:[%s3 + $0x2] sm:$0x1]
    %v51 = vld [vmem:[%s3 + $0x3] sm:$0x1]
    %v52 = vld [vmem:[%s4] sm:$0xff]
    %v53 = vld [vmem:[%s4 + $0x8] sm:$0xff]
    %v54 = vld [vmem:[%s4 + $0x10] sm:$0xff]
    %v55 = vld [vmem:[%s4 + $0x18] sm:$0xff]
    %v56 = vld [vmem:[%s5] sm:$0xff]
    %v57 = vlaneseq
    %v58 = vshrl.u32 %v57, 7
    %v59 = vsub.s32 0, %v58
    %v60 = vrot.slane %v48, %v59
    %vm61 = vcmask 261120
    %v63 = vsel %vm61, %v24, 0
    %65 = vmatprep.subr.mxu0 0.0
    %66 = vmatpush1.msra.mxu0 %v29
    %67 = vmatprep.subr.mxu0 0.0
    %68 = vmatpush1.msra.mxu0 %v30
    %69 = vmatprep.subr.mxu0 0.0
    %70 = vmatpush1.msra.mxu0 %v31
    %71 = vmatprep.subr.mxu0 0.0
    %72 = vmatpush1.msra.mxu0 %v32
    %73 = vmatprep.subr.mxu0 0.0
    %74 = vmatpush1.msra.mxu0 0.0
    %75 = vmatprep.subr.mxu0 0.0
    %76 = vmatpush1.msra.mxu0 0.0
    %77 = vmatprep.subr.mxu0 0.0
    %78 = vmatpush1.msra.mxu0 0.0
    %79 = vmatprep.subr.mxu0 0.0
    %80 = vmatpush1.msra.mxu0 0.0
    %81 = vmatprep.subr.mxu0 0.0
    %82 = vmatpush1.msra.mxu0 0.0
    %83 = vmatprep.subr.mxu0 0.0
    %84 = vmatpush1.msra.mxu0 0.0
    %85 = vmatprep.subr.mxu0 0.0
    %86 = vmatpush1.msra.mxu0 0.0
    %87 = vmatprep.subr.mxu0 0.0
    %88 = vmatpush1.msra.mxu0 0.0
    %89 = vmatprep.subr.mxu0 0.0
    %90 = vmatpush1.msra.mxu0 0.0
    %91 = vmatprep.subr.mxu0 0.0
    %92 = vmatpush1.msra.mxu0 0.0
    %93 = vmatprep.subr.mxu0 0.0
    %94 = vmatpush1.msra.mxu0 0.0
    %95 = vmatprep.subr.mxu0 0.0
    %96 = vmatpush1.msra.mxu0 0.0
    %97 = vmatprep.subr.mxu0 0.0
    %98 = vmatpush1.msra.mxu0 0.0
    %99 = vmatprep.subr.mxu0 0.0
    %100 = vmatpush1.msra.mxu0 0.0
    %101 = vmatprep.subr.mxu0 0.0
    %102 = vmatpush1.msra.mxu0 0.0
    %103 = vmatprep.subr.mxu0 0.0
    %104 = vmatpush1.msra.mxu0 0.0
    %105 = vmatprep.subr.mxu0 0.0
    %106 = vmatpush1.msra.mxu0 0.0
    %107 = vmatprep.subr.mxu0 0.0
    %108 = vmatpush1.msra.mxu0 0.0
    %109 = vmatprep.subr.mxu0 0.0
    %110 = vmatpush1.msra.mxu0 0.0
    %111 = vmatprep.subr.mxu0 0.0
    %112 = vmatpush1.msra.mxu0 0.0
    %113 = vmatprep.subr.mxu0 0.0
    %114 = vmatpush1.msra.mxu0 0.0
    %115 = vmatprep.subr.mxu0 0.0
    %116 = vmatpush1.msra.mxu0 0.0
    %117 = vmatprep.subr.mxu0 0.0
    %118 = vmatpush1.msra.mxu0 0.0
    %119 = vmatprep.subr.mxu0 0.0
    %120 = vmatpush1.msra.mxu0 0.0
    %121 = vmatprep.subr.mxu0 0.0
    %122 = vmatpush1.msra.mxu0 0.0
    %123 = vmatprep.subr.mxu0 0.0
    %124 = vmatpush1.msra.mxu0 0.0
    %125 = vmatprep.subr.mxu0 0.0
    %126 = vmatpush1.msra.mxu0 0.0
    %127 = vmatprep.subr.mxu0 0.0
    %128 = vmatpush1.msra.mxu0 0.0
    %129 = vmatprep.mubr.f32.mxu0 0.0
    %130 = vmatmul.mubr.f32.gmra.mrb[0].mxu0 %v63
    %v131 = vpop.f32.mrb[0].mxu0
    %v132 = vadd.f32 %v60, %v131
    %v133 = vpop.f32.mrb[0].mxu0
    %134 = vdwg.mxu0
    %v135 = vlaneseq
    %v136 = vshrl.u32 %v135, 7
    %v137 = vsub.s32 0, %v136
    %v138 = vrot.slane %v50, %v137
    %v140 = vsel %vm61, %v25, 0
    %v143 = vsel %vm61, %v26, 0
    %v146 = vsel %vm61, %v27, 0
    %v149 = vsel %vm61, %v28, 0
    %151 = vmatprep.subr.mxu0 0.0
    %152 = vmatpush1.msra.mxu0 %v39
    %153 = vmatprep.subr.mxu0 0.0
    %154 = vmatpush1.msra.mxu0 %v40
    %155 = vmatprep.subr.mxu0 0.0
    %156 = vmatpush1.msra.mxu0 %v41
    %157 = vmatprep.subr.mxu0 0.0
    %158 = vmatpush1.msra.mxu0 %v42
    %159 = vmatprep.subr.mxu0 0.0
    %160 = vmatpush1.msra.mxu0 0.0
    %161 = vmatprep.subr.mxu0 0.0
    %162 = vmatpush1.msra.mxu0 0.0
    %163 = vmatprep.subr.mxu0 0.0
    %164 = vmatpush1.msra.mxu0 0.0
    %165 = vmatprep.subr.mxu0 0.0
    %166 = vmatpush1.msra.mxu0 0.0
    %167 = vmatprep.subr.mxu0 0.0
    %168 = vmatpush1.msra.mxu0 0.0
    %169 = vmatprep.subr.mxu0 0.0
    %170 = vmatpush1.msra.mxu0 0.0
    %171 = vmatprep.subr.mxu0 0.0
    %172 = vmatpush1.msra.mxu0 0.0
    %173 = vmatprep.subr.mxu0 0.0
    %174 = vmatpush1.msra.mxu0 0.0
    %175 = vmatprep.subr.mxu0 0.0
    %176 = vmatpush1.msra.mxu0 0.0
    %177 = vmatprep.subr.mxu0 0.0
    %178 = vmatpush1.msra.mxu0 0.0
    %179 = vmatprep.subr.mxu0 0.0
    %180 = vmatpush1.msra.mxu0 0.0
    %181 = vmatprep.subr.mxu0 0.0
    %182 = vmatpush1.msra.mxu0 0.0
    %183 = vmatprep.subr.mxu0 0.0
    %184 = vmatpush1.msra.mxu0 0.0
    %185 = vmatprep.subr.mxu0 0.0
    %186 = vmatpush1.msra.mxu0 0.0
    %187 = vmatprep.subr.mxu0 0.0
    %188 = vmatpush1.msra.mxu0 0.0
    %189 = vmatprep.subr.mxu0 0.0
    %190 = vmatpush1.msra.mxu0 0.0
    %191 = vmatprep.subr.mxu0 0.0
    %192 = vmatpush1.msra.mxu0 0.0
    %193 = vmatprep.subr.mxu0 0.0
    %194 = vmatpush1.msra.mxu0 0.0
    %195 = vmatprep.subr.mxu0 0.0
    %196 = vmatpush1.msra.mxu0 0.0
    %197 = vmatprep.subr.mxu0 0.0
    %198 = vmatpush1.msra.mxu0 0.0
    %199 = vmatprep.subr.mxu0 0.0
    %200 = vmatpush1.msra.mxu0 0.0
    %201 = vmatprep.subr.mxu0 0.0
    %202 = vmatpush1.msra.mxu0 0.0
    %203 = vmatprep.subr.mxu0 0.0
    %204 = vmatpush1.msra.mxu0 0.0
    %205 = vmatprep.subr.mxu0 0.0
    %206 = vmatpush1.msra.mxu0 0.0
    %207 = vmatprep.subr.mxu0 0.0
    %208 = vmatpush1.msra.mxu0 0.0
    %209 = vmatprep.subr.mxu0 0.0
    %210 = vmatpush1.msra.mxu0 0.0
    %211 = vmatprep.subr.mxu0 0.0
    %212 = vmatpush1.msra.mxu0 0.0
    %213 = vmatprep.subr.mxu0 0.0
    %214 = vmatpush1.msra.mxu0 0.0
    %215 = vmatprep.mubr.f32.mxu0 0.0
    %216 = vmatmul.mubr.f32.gmra.mrb[0].mxu0 %v140
    %v217 = vpop.f32.mrb[0].mxu0
    %v218 = vadd.f32 %v138, %v217
    %v219 = vpop.f32.mrb[0].mxu0
    %220 = vmatprep.mubr.f32.mxu0 0.0
    %221 = vmatmul.mubr.f32.gmra.mrb[0].mxu0 %v143
    %v222 = vpop.f32.mrb[0].mxu0
    %v223 = vadd.f32 %v138, %v222
    %v224 = vpop.f32.mrb[0].mxu0
    %225 = vmatprep.mubr.f32.mxu0 0.0
    %226 = vmatmul.mubr.f32.gmra.mrb[0].mxu0 %v146
    %v227 = vpop.f32.mrb[0].mxu0
    %v228 = vadd.f32 %v138, %v227
    %v229 = vpop.f32.mrb[0].mxu0
    %230 = vmatprep.mubr.f32.mxu0 0.0
    %231 = vmatmul.mubr.f32.gmra.mrb[0].mxu0 %v149
    %v232 = vpop.f32.mrb[0].mxu0
    %v233 = vadd.f32 %v138, %v232
    %v234 = vpop.f32.mrb[0].mxu0
    %235 = vdwg.mxu0
    %v236 = vmul.f32 %v52, %v132
    %v237 = vmul.f32 %v53, %v132
    %v238 = vmul.f32 %v54, %v132
    %v239 = vmul.f32 %v55, %v132
    %v241 = vsel %vm61, %v236, 0
    %v244 = vsel %vm61, %v237, 0
    %v247 = vsel %vm61, %v238, 0
    %v250 = vsel %vm61, %v239, 0
    %252 = vmatprep.subr.mxu0 0.0
    %253 = vmatpush1.msra.mxu0 %v34
    %254 = vmatprep.subr.mxu0 0.0
    %255 = vmatpush1.msra.mxu0 %v35
    %256 = vmatprep.subr.mxu0 0.0
    %257 = vmatpush1.msra.mxu0 %v36
    %258 = vmatprep.subr.mxu0 0.0
    %259 = vmatpush1.msra.mxu0 %v37
    %260 = vmatprep.subr.mxu0 0.0
    %261 = vmatpush1.msra.mxu0 0.0
    %262 = vmatprep.subr.mxu0 0.0
    %263 = vmatpush1.msra.mxu0 0.0
    %264 = vmatprep.subr.mxu0 0.0
    %265 = vmatpush1.msra.mxu0 0.0
    %266 = vmatprep.subr.mxu0 0.0
    %267 = vmatpush1.msra.mxu0 0.0
    %268 = vmatprep.subr.mxu0 0.0
    %269 = vmatpush1.msra.mxu0 0.0
    %270 = vmatprep.subr.mxu0 0.0
    %271 = vmatpush1.msra.mxu0 0.0
    %272 = vmatprep.subr.mxu0 0.0
    %273 = vmatpush1.msra.mxu0 0.0
    %274 = vmatprep.subr.mxu0 0.0
    %275 = vmatpush1.msra.mxu0 0.0
    %276 = vmatprep.subr.mxu0 0.0
    %277 = vmatpush1.msra.mxu0 0.0
    %278 = vmatprep.subr.mxu0 0.0
    %279 = vmatpush1.msra.mxu0 0.0
    %280 = vmatprep.subr.mxu0 0.0
    %281 = vmatpush1.msra.mxu0 0.0
    %282 = vmatprep.subr.mxu0 0.0
    %283 = vmatpush1.msra.mxu0 0.0
    %284 = vmatprep.subr.mxu0 0.0
    %285 = vmatpush1.msra.mxu0 0.0
    %286 = vmatprep.subr.mxu0 0.0
    %287 = vmatpush1.msra.mxu0 0.0
    %288 = vmatprep.subr.mxu0 0.0
    %289 = vmatpush1.msra.mxu0 0.0
    %290 = vmatprep.subr.mxu0 0.0
    %291 = vmatpush1.msra.mxu0 0.0
    %292 = vmatprep.subr.mxu0 0.0
    %293 = vmatpush1.msra.mxu0 0.0
    %294 = vmatprep.subr.mxu0 0.0
    %295 = vmatpush1.msra.mxu0 0.0
    %296 = vmatprep.subr.mxu0 0.0
    %297 = vmatpush1.msra.mxu0 0.0
    %298 = vmatprep.subr.mxu0 0.0
    %299 = vmatpush1.msra.mxu0 0.0
    %300 = vmatprep.subr.mxu0 0.0
    %301 = vmatpush1.msra.mxu0 0.0
    %302 = vmatprep.subr.mxu0 0.0
    %303 = vmatpush1.msra.mxu0 0.0
    %304 = vmatprep.subr.mxu0 0.0
    %305 = vmatpush1.msra.mxu0 0.0
    %306 = vmatprep.subr.mxu0 0.0
    %307 = vmatpush1.msra.mxu0 0.0
    %308 = vmatprep.subr.mxu0 0.0
    %309 = vmatpush1.msra.mxu0 0.0
    %310 = vmatprep.subr.mxu0 0.0
    %311 = vmatpush1.msra.mxu0 0.0
    %312 = vmatprep.subr.mxu0 0.0
    %313 = vmatpush1.msra.mxu0 0.0
    %314 = vmatprep.subr.mxu0 0.0
    %315 = vmatpush1.msra.mxu0 0.0
    %316 = vmatprep.mubr.f32.mxu0 0.0
    %317 = vmatmul.mubr.f32.gmra.mrb[0].mxu0 %v241
    %v318 = vpop.f32.mrb[0].mxu0
    %v319 = vadd.f32 0.0, %v318
    %v320 = vpop.f32.mrb[0].mxu0
    %321 = vmatprep.mubr.f32.mxu0 0.0
    %322 = vmatmul.mubr.f32.gmra.mrb[0].mxu0 %v244
    %v323 = vpop.f32.mrb[0].mxu0
    %v324 = vadd.f32 0.0, %v323
    %v325 = vpop.f32.mrb[0].mxu0
    %326 = vmatprep.mubr.f32.mxu0 0.0
    %327 = vmatmul.mubr.f32.gmra.mrb[0].mxu0 %v247
    %v328 = vpop.f32.mrb[0].mxu0
    %v329 = vadd.f32 0.0, %v328
    %v330 = vpop.f32.mrb[0].mxu0
    %331 = vmatprep.mubr.f32.mxu0 0.0
    %332 = vmatmul.mubr.f32.gmra.mrb[0].mxu0 %v250
    %v333 = vpop.f32.mrb[0].mxu0
    %v334 = vadd.f32 0.0, %v333
    %v335 = vpop.f32.mrb[0].mxu0
    %336 = vdwg.mxu0
    %v337 = vlaneseq
    %v338 = vshrl.u32 %v337, 7
    %v339 = vsub.s32 0, %v338
    %v340 = vrot.slane %v49, %v339
    %v341 = vmul.f32 %v236, %v340
    %v342 = vmul.f32 %v237, %v340
    %v343 = vmul.f32 %v238, %v340
    %v344 = vmul.f32 %v239, %v340
    %v345 = vsel %vm61, %v341, 0.0
    %346 = vadd.xlane.f32.xlu0 %v345
    %v347 = vpop.xlane.xlu0 %346
    %v348 = vsel %vm61, %v342, 0.0
    %349 = vadd.xlane.f32.xlu0 %v348
    %v350 = vpop.xlane.xlu0 %349
    %v351 = vsel %vm61, %v343, 0.0
    %352 = vadd.xlane.f32.xlu0 %v351
    %v353 = vpop.xlane.xlu0 %352
    %v354 = vsel %vm61, %v344, 0.0
    %355 = vadd.xlane.f32.xlu0 %v354
    %v356 = vpop.xlane.xlu0 %355
    %v358 = vsel %vm61, %v319, 0
    %v361 = vsel %vm61, %v324, 0
    %v364 = vsel %vm61, %v329, 0
    %v367 = vsel %vm61, %v334, 0
    %369 = vmatprep.subr.mxu0 0.0
    %370 = vmatpush1.xpose.msra.mxu0 %v140
    %371 = vmatprep.subr.mxu0 0.0
    %372 = vmatpush1.xpose.msra.mxu0 %v143
    %373 = vmatprep.subr.mxu0 0.0
    %374 = vmatpush1.xpose.msra.mxu0 0.0
    %375 = vmatprep.subr.mxu0 0.0
    %376 = vmatpush1.xpose.msra.mxu0 0.0
    %377 = vmatprep.subr.mxu0 0.0
    %378 = vmatpush1.xpose.msra.mxu0 0.0
    %379 = vmatprep.subr.mxu0 0.0
    %380 = vmatpush1.xpose.msra.mxu0 0.0
    %381 = vmatprep.subr.mxu0 0.0
    %382 = vmatpush1.xpose.msra.mxu0 0.0
    %383 = vmatprep.subr.mxu0 0.0
    %384 = vmatpush1.xpose.msra.mxu0 0.0
    %385 = vmatprep.subr.mxu0 0.0
    %386 = vmatpush1.xpose.msra.mxu0 0.0
    %387 = vmatprep.subr.mxu0 0.0
    %388 = vmatpush1.xpose.msra.mxu0 0.0
    %389 = vmatprep.subr.mxu0 0.0
    %390 = vmatpush1.xpose.msra.mxu0 0.0
    %391 = vmatprep.subr.mxu0 0.0
    %392 = vmatpush1.xpose.msra.mxu0 0.0
    %393 = vmatprep.subr.mxu0 0.0
    %394 = vmatpush1.xpose.msra.mxu0 0.0
    %395 = vmatprep.subr.mxu0 0.0
    %396 = vmatpush1.xpose.msra.mxu0 0.0
    %397 = vmatprep.subr.mxu0 0.0
    %398 = vmatpush1.xpose.msra.mxu0 0.0
    %399 = vmatprep.subr.mxu0 0.0
    %400 = vmatpush1.xpose.msra.mxu0 0.0
    %401 = vmatprep.subr.mxu0 0.0
    %402 = vmatpush1.xpose.msra.mxu0 0.0
    %403 = vmatprep.subr.mxu0 0.0
    %404 = vmatpush1.xpose.msra.mxu0 0.0
    %405 = vmatprep.subr.mxu0 0.0
    %406 = vmatpush1.xpose.msra.mxu0 0.0
    %407 = vmatprep.subr.mxu0 0.0
    %408 = vmatpush1.xpose.msra.mxu0 0.0
    %409 = vmatprep.subr.mxu0 0.0
    %410 = vmatpush1.xpose.msra.mxu0 0.0
    %411 = vmatprep.subr.mxu0 0.0
    %412 = vmatpush1.xpose.msra.mxu0 0.0
    %413 = vmatprep.subr.mxu0 0.0
    %414 = vmatpush1.xpose.msra.mxu0 0.0
    %415 = vmatprep.subr.mxu0 0.0
    %416 = vmatpush1.xpose.msra.mxu0 0.0
    %417 = vmatprep.subr.mxu0 0.0
    %418 = vmatpush1.xpose.msra.mxu0 0.0
    %419 = vmatprep.subr.mxu0 0.0
    %420 = vmatpush1.xpose.msra.mxu0 0.0
    %421 = vmatprep.subr.mxu0 0.0
    %422 = vmatpush1.xpose.msra.mxu0 0.0
    %423 = vmatprep.subr.mxu0 0.0
    %424 = vmatpush1.xpose.msra.mxu0 0.0
    %425 = vmatprep.subr.mxu0 0.0
    %426 = vmatpush1.xpose.msra.mxu0 0.0
    %427 = vmatprep.subr.mxu0 0.0
    %428 = vmatpush1.xpose.msra.mxu0 0.0
    %429 = vmatprep.subr.mxu0 0.0
    %430 = vmatpush1.xpose.msra.mxu0 0.0
    %431 = vmatprep.subr.mxu0 0.0
    %432 = vmatpush1.xpose.msra.mxu0 0.0
    %433 = vmatprep.mubr.f32.mxu0 0.0
    %434 = vmatmul.mubr.f32.gmra.mrb[0].mxu0 %v358
    %v435 = vpop.f32.mrb[0].mxu0
    %v436 = vadd.f32 %v347, %v435
    %v437 = vpop.f32.mrb[0].mxu0
    %438 = vmatprep.mubr.f32.mxu0 0.0
    %439 = vmatmul.mubr.f32.gmra.mrb[0].mxu0 %v361
    %v440 = vpop.f32.mrb[0].mxu0
    %v441 = vadd.f32 %v350, %v440
    %v442 = vpop.f32.mrb[0].mxu0
    %443 = vmatprep.mubr.f32.mxu0 0.0
    %444 = vmatmul.mubr.f32.gmra.mrb[0].mxu0 %v364
    %v445 = vpop.f32.mrb[0].mxu0
    %v446 = vadd.f32 %v353, %v445
    %v447 = vpop.f32.mrb[0].mxu0
    %448 = vmatprep.mubr.f32.mxu0 0.0
    %449 = vmatmul.mubr.f32.gmra.mrb[0].mxu0 %v367
    %v450 = vpop.f32.mrb[0].mxu0
    %v451 = vadd.f32 %v356, %v450
    %v452 = vpop.f32.mrb[0].mxu0
    %453 = vdwg.mxu0
    %454 = vmatprep.subr.mxu0 0.0
    %455 = vmatpush1.xpose.msra.mxu0 %v146
    %456 = vmatprep.subr.mxu0 0.0
    %457 = vmatpush1.xpose.msra.mxu0 %v149
    %458 = vmatprep.subr.mxu0 0.0
    %459 = vmatpush1.xpose.msra.mxu0 0.0
    %460 = vmatprep.subr.mxu0 0.0
    %461 = vmatpush1.xpose.msra.mxu0 0.0
    %462 = vmatprep.subr.mxu0 0.0
    %463 = vmatpush1.xpose.msra.mxu0 0.0
    %464 = vmatprep.subr.mxu0 0.0
    %465 = vmatpush1.xpose.msra.mxu0 0.0
    %466 = vmatprep.subr.mxu0 0.0
    %467 = vmatpush1.xpose.msra.mxu0 0.0
    %468 = vmatprep.subr.mxu0 0.0
    %469 = vmatpush1.xpose.msra.mxu0 0.0
    %470 = vmatprep.subr.mxu0 0.0
    %471 = vmatpush1.xpose.msra.mxu0 0.0
    %472 = vmatprep.subr.mxu0 0.0
    %473 = vmatpush1.xpose.msra.mxu0 0.0
    %474 = vmatprep.subr.mxu0 0.0
    %475 = vmatpush1.xpose.msra.mxu0 0.0
    %476 = vmatprep.subr.mxu0 0.0
    %477 = vmatpush1.xpose.msra.mxu0 0.0
    %478 = vmatprep.subr.mxu0 0.0
    %479 = vmatpush1.xpose.msra.mxu0 0.0
    %480 = vmatprep.subr.mxu0 0.0
    %481 = vmatpush1.xpose.msra.mxu0 0.0
    %482 = vmatprep.subr.mxu0 0.0
    %483 = vmatpush1.xpose.msra.mxu0 0.0
    %484 = vmatprep.subr.mxu0 0.0
    %485 = vmatpush1.xpose.msra.mxu0 0.0
    %486 = vmatprep.subr.mxu0 0.0
    %487 = vmatpush1.xpose.msra.mxu0 0.0
    %488 = vmatprep.subr.mxu0 0.0
    %489 = vmatpush1.xpose.msra.mxu0 0.0
    %490 = vmatprep.subr.mxu0 0.0
    %491 = vmatpush1.xpose.msra.mxu0 0.0
    %492 = vmatprep.subr.mxu0 0.0
    %493 = vmatpush1.xpose.msra.mxu0 0.0
    %494 = vmatprep.subr.mxu0 0.0
    %495 = vmatpush1.xpose.msra.mxu0 0.0
    %496 = vmatprep.subr.mxu0 0.0
    %497 = vmatpush1.xpose.msra.mxu0 0.0
    %498 = vmatprep.subr.mxu0 0.0
    %499 = vmatpush1.xpose.msra.mxu0 0.0
    %500 = vmatprep.subr.mxu0 0.0
    %501 = vmatpush1.xpose.msra.mxu0 0.0
    %502 = vmatprep.subr.mxu0 0.0
    %503 = vmatpush1.xpose.msra.mxu0 0.0
    %504 = vmatprep.subr.mxu0 0.0
    %505 = vmatpush1.xpose.msra.mxu0 0.0
    %506 = vmatprep.subr.mxu0 0.0
    %507 = vmatpush1.xpose.msra.mxu0 0.0
    %508 = vmatprep.subr.mxu0 0.0
    %509 = vmatpush1.xpose.msra.mxu0 0.0
    %510 = vmatprep.subr.mxu0 0.0
    %511 = vmatpush1.xpose.msra.mxu0 0.0
    %512 = vmatprep.subr.mxu0 0.0
    %513 = vmatpush1.xpose.msra.mxu0 0.0
    %514 = vmatprep.subr.mxu0 0.0
    %515 = vmatpush1.xpose.msra.mxu0 0.0
    %516 = vmatprep.subr.mxu0 0.0
    %517 = vmatpush1.xpose.msra.mxu0 0.0
    %518 = vmatprep.mubr.f32.mxu0 0.0
    %519 = vmatmul.mubr.f32.gmra.mrb[0].mxu0 %v358
    %v520 = vpop.f32.mrb[0].mxu0
    %v521 = vadd.f32 %v347, %v520
    %v522 = vpop.f32.mrb[0].mxu0
    %523 = vmatprep.mubr.f32.mxu0 0.0
    %524 = vmatmul.mubr.f32.gmra.mrb[0].mxu0 %v361
    %v525 = vpop.f32.mrb[0].mxu0
    %v526 = vadd.f32 %v350, %v525
    %v527 = vpop.f32.mrb[0].mxu0
    %528 = vmatprep.mubr.f32.mxu0 0.0
    %529 = vmatmul.mubr.f32.gmra.mrb[0].mxu0 %v364
    %v530 = vpop.f32.mrb[0].mxu0
    %v531 = vadd.f32 %v353, %v530
    %v532 = vpop.f32.mrb[0].mxu0
    %533 = vmatprep.mubr.f32.mxu0 0.0
    %534 = vmatmul.mubr.f32.gmra.mrb[0].mxu0 %v367
    %v535 = vpop.f32.mrb[0].mxu0
    %v536 = vadd.f32 %v356, %v535
    %v537 = vpop.f32.mrb[0].mxu0
    %538 = vdwg.mxu0
    %v539 = vmul.f32 %v436, 0.17677669
    %v540 = vmul.f32 %v441, 0.17677669
    %v541 = vmul.f32 %v446, 0.17677669
    %v542 = vmul.f32 %v451, 0.17677669
    %v543 = vmul.f32 %v521, 0.17677669
    %v544 = vmul.f32 %v526, 0.17677669
    %v545 = vmul.f32 %v531, 0.17677669
    %v546 = vmul.f32 %v536, 0.17677669
    %vm547 = vcmask 130048
    %v548 = vsel %vm547, %v539, -inf
    %549 = vmax.xlane.f32.xlu0 %v548
    %v550 = vpop.xlane.xlu0 %549
    %v551 = vsel %vm547, %v540, -inf
    %552 = vmax.xlane.f32.xlu0 %v551
    %v553 = vpop.xlane.xlu0 %552
    %v554 = vsel %vm547, %v541, -inf
    %555 = vmax.xlane.f32.xlu0 %v554
    %v556 = vpop.xlane.xlu0 %555
    %v557 = vsel %vm547, %v542, -inf
    %558 = vmax.xlane.f32.xlu0 %v557
    %v559 = vpop.xlane.xlu0 %558
    %v560 = vsel %vm547, %v543, -inf
    %561 = vmax.xlane.f32.xlu0 %v560
    %v562 = vpop.xlane.xlu0 %561
    %v563 = vsel %vm547, %v544, -inf
    %564 = vmax.xlane.f32.xlu0 %v563
    %v565 = vpop.xlane.xlu0 %564
    %v566 = vsel %vm547, %v545, -inf
    %567 = vmax.xlane.f32.xlu0 %v566
    %v568 = vpop.xlane.xlu0 %567
    %v569 = vsel %vm547, %v546, -inf
    %570 = vmax.xlane.f32.xlu0 %v569
    %v571 = vpop.xlane.xlu0 %570
    %v572 = vsub.f32 %v539, %v550
    %v573 = vsub.f32 %v540, %v553
    %v574 = vsub.f32 %v541, %v556
    %v575 = vsub.f32 %v542, %v559
    %v576 = vsub.f32 %v543, %v562
    %v577 = vsub.f32 %v544, %v565
    %v578 = vsub.f32 %v545, %v568
    %v579 = vsub.f32 %v546, %v571
    %v580 = vmul.f32 %v572, 1.442695
    %v581 = vpow.pop %v580
    %v582 = vmul.f32 %v573, 1.442695
    %v583 = vpow.pop %v582
    %v584 = vmul.f32 %v574, 1.442695
    %v585 = vpow.pop %v584
    %v586 = vmul.f32 %v575, 1.442695
    %v587 = vpow.pop %v586
    %v588 = vmul.f32 %v576, 1.442695
    %v589 = vpow.pop %v588
    %v590 = vmul.f32 %v577, 1.442695
    %v591 = vpow.pop %v590
    %v592 = vmul.f32 %v578, 1.442695
    %v593 = vpow.pop %v592
    %v594 = vmul.f32 %v579, 1.442695
    %v595 = vpow.pop %v594
    %v596 = vsel %vm547, %v581, 0.0
    %597 = vadd.xlane.f32.xlu0 %v596
    %v598 = vpop.xlane.xlu0 %597
    %v599 = vsel %vm547, %v583, 0.0
    %600 = vadd.xlane.f32.xlu0 %v599
    %v601 = vpop.xlane.xlu0 %600
    %v602 = vsel %vm547, %v585, 0.0
    %603 = vadd.xlane.f32.xlu0 %v602
    %v604 = vpop.xlane.xlu0 %603
    %v605 = vsel %vm547, %v587, 0.0
    %606 = vadd.xlane.f32.xlu0 %v605
    %v607 = vpop.xlane.xlu0 %606
    %v608 = vsel %vm547, %v589, 0.0
    %609 = vadd.xlane.f32.xlu0 %v608
    %v610 = vpop.xlane.xlu0 %609
    %v611 = vsel %vm547, %v591, 0.0
    %612 = vadd.xlane.f32.xlu0 %v611
    %v613 = vpop.xlane.xlu0 %612
    %v614 = vsel %vm547, %v593, 0.0
    %615 = vadd.xlane.f32.xlu0 %v614
    %v616 = vpop.xlane.xlu0 %615
    %v617 = vsel %vm547, %v595, 0.0
    %618 = vadd.xlane.f32.xlu0 %v617
    %v619 = vpop.xlane.xlu0 %618
    %v620 = vrcp.pop %v598
    %v621 = vrcp.pop %v601
    %v622 = vrcp.pop %v604
    %v623 = vrcp.pop %v607
    %v624 = vrcp.pop %v610
    %v625 = vrcp.pop %v613
    %v626 = vrcp.pop %v616
    %v627 = vrcp.pop %v619
    %v628 = vmul.f32 %v581, %v620
    %v629 = vmul.f32 %v583, %v621
    %v630 = vmul.f32 %v585, %v622
    %v631 = vmul.f32 %v587, %v623
    %v632 = vmul.f32 %v589, %v624
    %v633 = vmul.f32 %v591, %v625
    %v634 = vmul.f32 %v593, %v626
    %v635 = vmul.f32 %v595, %v627
    %v637 = vsel %vm547, %v628, 0
    %v640 = vsel %vm547, %v629, 0
    %v643 = vsel %vm547, %v630, 0
    %v646 = vsel %vm547, %v631, 0
    %648 = vmatprep.subr.mxu0 0.0
    %649 = vmatpush1.msra.mxu0 %v218
    %650 = vmatprep.subr.mxu0 0.0
    %651 = vmatpush1.msra.mxu0 %v223
    %652 = vmatprep.subr.mxu0 0.0
    %653 = vmatpush1.msra.mxu0 0.0
    %654 = vmatprep.subr.mxu0 0.0
    %655 = vmatpush1.msra.mxu0 0.0
    %656 = vmatprep.subr.mxu0 0.0
    %657 = vmatpush1.msra.mxu0 0.0
    %658 = vmatprep.subr.mxu0 0.0
    %659 = vmatpush1.msra.mxu0 0.0
    %660 = vmatprep.subr.mxu0 0.0
    %661 = vmatpush1.msra.mxu0 0.0
    %662 = vmatprep.subr.mxu0 0.0
    %663 = vmatpush1.msra.mxu0 0.0
    %664 = vmatprep.subr.mxu0 0.0
    %665 = vmatpush1.msra.mxu0 0.0
    %666 = vmatprep.subr.mxu0 0.0
    %667 = vmatpush1.msra.mxu0 0.0
    %668 = vmatprep.subr.mxu0 0.0
    %669 = vmatpush1.msra.mxu0 0.0
    %670 = vmatprep.subr.mxu0 0.0
    %671 = vmatpush1.msra.mxu0 0.0
    %672 = vmatprep.subr.mxu0 0.0
    %673 = vmatpush1.msra.mxu0 0.0
    %674 = vmatprep.subr.mxu0 0.0
    %675 = vmatpush1.msra.mxu0 0.0
    %676 = vmatprep.subr.mxu0 0.0
    %677 = vmatpush1.msra.mxu0 0.0
    %678 = vmatprep.subr.mxu0 0.0
    %679 = vmatpush1.msra.mxu0 0.0
    %680 = vmatprep.subr.mxu0 0.0
    %681 = vmatpush1.msra.mxu0 0.0
    %682 = vmatprep.subr.mxu0 0.0
    %683 = vmatpush1.msra.mxu0 0.0
    %684 = vmatprep.subr.mxu0 0.0
    %685 = vmatpush1.msra.mxu0 0.0
    %686 = vmatprep.subr.mxu0 0.0
    %687 = vmatpush1.msra.mxu0 0.0
    %688 = vmatprep.subr.mxu0 0.0
    %689 = vmatpush1.msra.mxu0 0.0
    %690 = vmatprep.subr.mxu0 0.0
    %691 = vmatpush1.msra.mxu0 0.0
    %692 = vmatprep.subr.mxu0 0.0
    %693 = vmatpush1.msra.mxu0 0.0
    %694 = vmatprep.subr.mxu0 0.0
    %695 = vmatpush1.msra.mxu0 0.0
    %696 = vmatprep.subr.mxu0 0.0
    %697 = vmatpush1.msra.mxu0 0.0
    %698 = vmatprep.subr.mxu0 0.0
    %699 = vmatpush1.msra.mxu0 0.0
    %700 = vmatprep.subr.mxu0 0.0
    %701 = vmatpush1.msra.mxu0 0.0
    %702 = vmatprep.subr.mxu0 0.0
    %703 = vmatpush1.msra.mxu0 0.0
    %704 = vmatprep.subr.mxu0 0.0
    %705 = vmatpush1.msra.mxu0 0.0
    %706 = vmatprep.subr.mxu0 0.0
    %707 = vmatpush1.msra.mxu0 0.0
    %708 = vmatprep.subr.mxu0 0.0
    %709 = vmatpush1.msra.mxu0 0.0
    %710 = vmatprep.subr.mxu0 0.0
    %711 = vmatpush1.msra.mxu0 0.0
    %712 = vmatprep.mubr.f32.mxu0 0.0
    %713 = vmatmul.mubr.f32.gmra.mrb[0].mxu0 %v637
    %v714 = vpop.f32.mrb[0].mxu0
    %v715 = vadd.f32 0.0, %v714
    %v716 = vpop.f32.mrb[0].mxu0
    %717 = vmatprep.mubr.f32.mxu0 0.0
    %718 = vmatmul.mubr.f32.gmra.mrb[0].mxu0 %v640
    %v719 = vpop.f32.mrb[0].mxu0
    %v720 = vadd.f32 0.0, %v719
    %v721 = vpop.f32.mrb[0].mxu0
    %722 = vmatprep.mubr.f32.mxu0 0.0
    %723 = vmatmul.mubr.f32.gmra.mrb[0].mxu0 %v643
    %v724 = vpop.f32.mrb[0].mxu0
    %v725 = vadd.f32 0.0, %v724
    %v726 = vpop.f32.mrb[0].mxu0
    %727 = vmatprep.mubr.f32.mxu0 0.0
    %728 = vmatmul.mubr.f32.gmra.mrb[0].mxu0 %v646
    %v729 = vpop.f32.mrb[0].mxu0
    %v730 = vadd.f32 0.0, %v729
    %v731 = vpop.f32.mrb[0].mxu0
    %732 = vdwg.mxu0
    %v734 = vsel %vm547, %v632, 0
    %v737 = vsel %vm547, %v633, 0
    %v740 = vsel %vm547, %v634, 0
    %v743 = vsel %vm547, %v635, 0
    %745 = vmatprep.subr.mxu0 0.0
    %746 = vmatpush1.msra.mxu0 %v228
    %747 = vmatprep.subr.mxu0 0.0
    %748 = vmatpush1.msra.mxu0 %v233
    %749 = vmatprep.subr.mxu0 0.0
    %750 = vmatpush1.msra.mxu0 0.0
    %751 = vmatprep.subr.mxu0 0.0
    %752 = vmatpush1.msra.mxu0 0.0
    %753 = vmatprep.subr.mxu0 0.0
    %754 = vmatpush1.msra.mxu0 0.0
    %755 = vmatprep.subr.mxu0 0.0
    %756 = vmatpush1.msra.mxu0 0.0
    %757 = vmatprep.subr.mxu0 0.0
    %758 = vmatpush1.msra.mxu0 0.0
    %759 = vmatprep.subr.mxu0 0.0
    %760 = vmatpush1.msra.mxu0 0.0
    %761 = vmatprep.subr.mxu0 0.0
    %762 = vmatpush1.msra.mxu0 0.0
    %763 = vmatprep.subr.mxu0 0.0
    %764 = vmatpush1.msra.mxu0 0.0
    %765 = vmatprep.subr.mxu0 0.0
    %766 = vmatpush1.msra.mxu0 0.0
    %767 = vmatprep.subr.mxu0 0.0
    %768 = vmatpush1.msra.mxu0 0.0
    %769 = vmatprep.subr.mxu0 0.0
    %770 = vmatpush1.msra.mxu0 0.0
    %771 = vmatprep.subr.mxu0 0.0
    %772 = vmatpush1.msra.mxu0 0.0
    %773 = vmatprep.subr.mxu0 0.0
    %774 = vmatpush1.msra.mxu0 0.0
    %775 = vmatprep.subr.mxu0 0.0
    %776 = vmatpush1.msra.mxu0 0.0
    %777 = vmatprep.subr.mxu0 0.0
    %778 = vmatpush1.msra.mxu0 0.0
    %779 = vmatprep.subr.mxu0 0.0
    %780 = vmatpush1.msra.mxu0 0.0
    %781 = vmatprep.subr.mxu0 0.0
    %782 = vmatpush1.msra.mxu0 0.0
    %783 = vmatprep.subr.mxu0 0.0
    %784 = vmatpush1.msra.mxu0 0.0
    %785 = vmatprep.subr.mxu0 0.0
    %786 = vmatpush1.msra.mxu0 0.0
    %787 = vmatprep.subr.mxu0 0.0
    %788 = vmatpush1.msra.mxu0 0.0
    %789 = vmatprep.subr.mxu0 0.0
    %790 = vmatpush1.msra.mxu0 0.0
    %791 = vmatprep.subr.mxu0 0.0
    %792 = vmatpush1.msra.mxu0 0.0
    %793 = vmatprep.subr.mxu0 0.0
    %794 = vmatpush1.msra.mxu0 0.0
    %795 = vmatprep.subr.mxu0 0.0
    %796 = vmatpush1.msra.mxu0 0.0
    %797 = vmatprep.subr.mxu0 0.0
    %798 = vmatpush1.msra.mxu0 0.0
    %799 = vmatprep.subr.mxu0 0.0
    %800 = vmatpush1.msra.mxu0 0.0
    %801 = vmatprep.subr.mxu0 0.0
    %802 = vmatpush1.msra.mxu0 0.0
    %803 = vmatprep.subr.mxu0 0.0
    %804 = vmatpush1.msra.mxu0 0.0
    %805 = vmatprep.subr.mxu0 0.0
    %806 = vmatpush1.msra.mxu0 0.0
    %807 = vmatprep.subr.mxu0 0.0
    %808 = vmatpush1.msra.mxu0 0.0
    %809 = vmatprep.mubr.f32.mxu0 0.0
    %810 = vmatmul.mubr.f32.gmra.mrb[0].mxu0 %v734
    %v811 = vpop.f32.mrb[0].mxu0
    %v812 = vadd.f32 0.0, %v811
    %v813 = vpop.f32.mrb[0].mxu0
    %814 = vmatprep.mubr.f32.mxu0 0.0
    %815 = vmatmul.mubr.f32.gmra.mrb[0].mxu0 %v737
    %v816 = vpop.f32.mrb[0].mxu0
    %v817 = vadd.f32 0.0, %v816
    %v818 = vpop.f32.mrb[0].mxu0
    %819 = vmatprep.mubr.f32.mxu0 0.0
    %820 = vmatmul.mubr.f32.gmra.mrb[0].mxu0 %v740
    %v821 = vpop.f32.mrb[0].mxu0
    %v822 = vadd.f32 0.0, %v821
    %v823 = vpop.f32.mrb[0].mxu0
    %824 = vmatprep.mubr.f32.mxu0 0.0
    %825 = vmatmul.mubr.f32.gmra.mrb[0].mxu0 %v743
    %v826 = vpop.f32.mrb[0].mxu0
    %v827 = vadd.f32 0.0, %v826
    %v828 = vpop.f32.mrb[0].mxu0
    %829 = vdwg.mxu0
    %v830 = vmul.f32 %v715, %v52
    %v831 = vmul.f32 %v720, %v53
    %v832 = vmul.f32 %v725, %v54
    %v833 = vmul.f32 %v730, %v55
    %v834 = vmul.f32 %v812, %v52
    %v835 = vmul.f32 %v817, %v53
    %v836 = vmul.f32 %v822, %v54
    %v837 = vmul.f32 %v827, %v55
    %v839 = vsel %vm61, %v56, 0
    %841 = vmatprep.subr.mxu0 0.0
    %842 = vmatpush1.msra.mxu0 %v830
    %843 = vmatprep.subr.mxu0 0.0
    %844 = vmatpush1.msra.mxu0 %v831
    %845 = vmatprep.subr.mxu0 0.0
    %846 = vmatpush1.msra.mxu0 %v832
    %847 = vmatprep.subr.mxu0 0.0
    %848 = vmatpush1.msra.mxu0 %v833
    %849 = vmatprep.subr.mxu0 0.0
    %850 = vmatpush1.msra.mxu0 0.0
    %851 = vmatprep.subr.mxu0 0.0
    %852 = vmatpush1.msra.mxu0 0.0
    %853 = vmatprep.subr.mxu0 0.0
    %854 = vmatpush1.msra.mxu0 0.0
    %855 = vmatprep.subr.mxu0 0.0
    %856 = vmatpush1.msra.mxu0 0.0
    %857 = vmatprep.subr.mxu0 0.0
    %858 = vmatpush1.msra.mxu0 0.0
    %859 = vmatprep.subr.mxu0 0.0
    %860 = vmatpush1.msra.mxu0 0.0
    %861 = vmatprep.subr.mxu0 0.0
    %862 = vmatpush1.msra.mxu0 0.0
    %863 = vmatprep.subr.mxu0 0.0
    %864 = vmatpush1.msra.mxu0 0.0
    %865 = vmatprep.subr.mxu0 0.0
    %866 = vmatpush1.msra.mxu0 0.0
    %867 = vmatprep.subr.mxu0 0.0
    %868 = vmatpush1.msra.mxu0 0.0
    %869 = vmatprep.subr.mxu0 0.0
    %870 = vmatpush1.msra.mxu0 0.0
    %871 = vmatprep.subr.mxu0 0.0
    %872 = vmatpush1.msra.mxu0 0.0
    %873 = vmatprep.subr.mxu0 0.0
    %874 = vmatpush1.msra.mxu0 0.0
    %875 = vmatprep.subr.mxu0 0.0
    %876 = vmatpush1.msra.mxu0 0.0
    %877 = vmatprep.subr.mxu0 0.0
    %878 = vmatpush1.msra.mxu0 0.0
    %879 = vmatprep.subr.mxu0 0.0
    %880 = vmatpush1.msra.mxu0 0.0
    %881 = vmatprep.subr.mxu0 0.0
    %882 = vmatpush1.msra.mxu0 0.0
    %883 = vmatprep.subr.mxu0 0.0
    %884 = vmatpush1.msra.mxu0 0.0
    %885 = vmatprep.subr.mxu0 0.0
    %886 = vmatpush1.msra.mxu0 0.0
    %887 = vmatprep.subr.mxu0 0.0
    %888 = vmatpush1.msra.mxu0 0.0
    %889 = vmatprep.subr.mxu0 0.0
    %890 = vmatpush1.msra.mxu0 0.0
    %891 = vmatprep.subr.mxu0 0.0
    %892 = vmatpush1.msra.mxu0 0.0
    %893 = vmatprep.subr.mxu0 0.0
    %894 = vmatpush1.msra.mxu0 0.0
    %895 = vmatprep.subr.mxu0 0.0
    %896 = vmatpush1.msra.mxu0 0.0
    %897 = vmatprep.subr.mxu0 0.0
    %898 = vmatpush1.msra.mxu0 0.0
    %899 = vmatprep.subr.mxu0 0.0
    %900 = vmatpush1.msra.mxu0 0.0
    %901 = vmatprep.subr.mxu0 0.0
    %902 = vmatpush1.msra.mxu0 0.0
    %903 = vmatprep.subr.mxu0 0.0
    %904 = vmatpush1.msra.mxu0 0.0
    %905 = vmatprep.mubr.f32.mxu0 0.0
    %906 = vmatmul.mubr.f32.gmra.mrb[0].mxu0 %v839
    %v907 = vpop.f32.mrb[0].mxu0
    %v908 = vadd.f32 0.0, %v907
    %v909 = vpop.f32.mrb[0].mxu0
    %910 = vdwg.mxu0
    %911 = vmatprep.subr.mxu0 0.0
    %912 = vmatpush1.msra.mxu0 %v834
    %913 = vmatprep.subr.mxu0 0.0
    %914 = vmatpush1.msra.mxu0 %v835
    %915 = vmatprep.subr.mxu0 0.0
    %916 = vmatpush1.msra.mxu0 %v836
    %917 = vmatprep.subr.mxu0 0.0
    %918 = vmatpush1.msra.mxu0 %v837
    %919 = vmatprep.subr.mxu0 0.0
    %920 = vmatpush1.msra.mxu0 0.0
    %921 = vmatprep.subr.mxu0 0.0
    %922 = vmatpush1.msra.mxu0 0.0
    %923 = vmatprep.subr.mxu0 0.0
    %924 = vmatpush1.msra.mxu0 0.0
    %925 = vmatprep.subr.mxu0 0.0
    %926 = vmatpush1.msra.mxu0 0.0
    %927 = vmatprep.subr.mxu0 0.0
    %928 = vmatpush1.msra.mxu0 0.0
    %929 = vmatprep.subr.mxu0 0.0
    %930 = vmatpush1.msra.mxu0 0.0
    %931 = vmatprep.subr.mxu0 0.0
    %932 = vmatpush1.msra.mxu0 0.0
    %933 = vmatprep.subr.mxu0 0.0
    %934 = vmatpush1.msra.mxu0 0.0
    %935 = vmatprep.subr.mxu0 0.0
    %936 = vmatpush1.msra.mxu0 0.0
    %937 = vmatprep.subr.mxu0 0.0
    %938 = vmatpush1.msra.mxu0 0.0
    %939 = vmatprep.subr.mxu0 0.0
    %940 = vmatpush1.msra.mxu0 0.0
    %941 = vmatprep.subr.mxu0 0.0
    %942 = vmatpush1.msra.mxu0 0.0
    %943 = vmatprep.subr.mxu0 0.0
    %944 = vmatpush1.msra.mxu0 0.0
    %945 = vmatprep.subr.mxu0 0.0
    %946 = vmatpush1.msra.mxu0 0.0
    %947 = vmatprep.subr.mxu0 0.0
    %948 = vmatpush1.msra.mxu0 0.0
    %949 = vmatprep.subr.mxu0 0.0
    %950 = vmatpush1.msra.mxu0 0.0
    %951 = vmatprep.subr.mxu0 0.0
    %952 = vmatpush1.msra.mxu0 0.0
    %953 = vmatprep.subr.mxu0 0.0
    %954 = vmatpush1.msra.mxu0 0.0
    %955 = vmatprep.subr.mxu0 0.0
    %956 = vmatpush1.msra.mxu0 0.0
    %957 = vmatprep.subr.mxu0 0.0
    %958 = vmatpush1.msra.mxu0 0.0
    %959 = vmatprep.subr.mxu0 0.0
    %960 = vmatpush1.msra.mxu0 0.0
    %961 = vmatprep.subr.mxu0 0.0
    %962 = vmatpush1.msra.mxu0 0.0
    %963 = vmatprep.subr.mxu0 0.0
    %964 = vmatpush1.msra.mxu0 0.0
    %965 = vmatprep.subr.mxu0 0.0
    %966 = vmatpush1.msra.mxu0 0.0
    %967 = vmatprep.subr.mxu0 0.0
    %968 = vmatpush1.msra.mxu0 0.0
    %969 = vmatprep.subr.mxu0 0.0
    %970 = vmatpush1.msra.mxu0 0.0
    %971 = vmatprep.subr.mxu0 0.0
    %972 = vmatpush1.msra.mxu0 0.0
    %973 = vmatprep.subr.mxu0 0.0
    %974 = vmatpush1.msra.mxu0 0.0
    %975 = vmatprep.mubr.f32.mxu0 0.0
    %976 = vmatmul.mubr.f32.gmra.mrb[0].mxu0 %v839
    %v977 = vpop.f32.mrb[0].mxu0
    %v978 = vadd.f32 0.0, %v977
    %v979 = vpop.f32.mrb[0].mxu0
    %980 = vdwg.mxu0
    %v981 = vadd.f32 %v132, %v908
    %v982 = vadd.f32 %v132, %v978
    %v983 = vlaneseq
    %v984 = vshrl.u32 %v983, 7
    %v985 = vsub.s32 0, %v984
    %v986 = vrot.slane %v51, %v985
    %v988 = vsel %vm61, %v981, 0
    %v991 = vsel %vm61, %v982, 0
    %993 = vmatprep.subr.mxu0 0.0
    %994 = vmatpush1.msra.mxu0 %v44
    %995 = vmatprep.subr.mxu0 0.0
    %996 = vmatpush1.msra.mxu0 %v45
    %997 = vmatprep.subr.mxu0 0.0
    %998 = vmatpush1.msra.mxu0 %v46
    %999 = vmatprep.subr.mxu0 0.0
    %1000 = vmatpush1.msra.mxu0 %v47
    %1001 = vmatprep.subr.mxu0 0.0
    %1002 = vmatpush1.msra.mxu0 0.0
    %1003 = vmatprep.subr.mxu0 0.0
    %1004 = vmatpush1.msra.mxu0 0.0
    %1005 = vmatprep.subr.mxu0 0.0
    %1006 = vmatpush1.msra.mxu0 0.0
    %1007 = vmatprep.subr.mxu0 0.0
    %1008 = vmatpush1.msra.mxu0 0.0
    %1009 = vmatprep.subr.mxu0 0.0
    %1010 = vmatpush1.msra.mxu0 0.0
    %1011 = vmatprep.subr.mxu0 0.0
    %1012 = vmatpush1.msra.mxu0 0.0
    %1013 = vmatprep.subr.mxu0 0.0
    %1014 = vmatpush1.msra.mxu0 0.0
    %1015 = vmatprep.subr.mxu0 0.0
    %1016 = vmatpush1.msra.mxu0 0.0
    %1017 = vmatprep.subr.mxu0 0.0
    %1018 = vmatpush1.msra.mxu0 0.0
    %1019 = vmatprep.subr.mxu0 0.0
    %1020 = vmatpush1.msra.mxu0 0.0
    %1021 = vmatprep.subr.mxu0 0.0
    %1022 = vmatpush1.msra.mxu0 0.0
    %1023 = vmatprep.subr.mxu0 0.0
    %1024 = vmatpush1.msra.mxu0 0.0
    %1025 = vmatprep.subr.mxu0 0.0
    %1026 = vmatpush1.msra.mxu0 0.0
    %1027 = vmatprep.subr.mxu0 0.0
    %1028 = vmatpush1.msra.mxu0 0.0
    %1029 = vmatprep.subr.mxu0 0.0
    %1030 = vmatpush1.msra.mxu0 0.0
    %1031 = vmatprep.subr.mxu0 0.0
    %1032 = vmatpush1.msra.mxu0 0.0
    %1033 = vmatprep.subr.mxu0 0.0
    %1034 = vmatpush1.msra.mxu0 0.0
    %1035 = vmatprep.subr.mxu0 0.0
    %1036 = vmatpush1.msra.mxu0 0.0
    %1037 = vmatprep.subr.mxu0 0.0
    %1038 = vmatpush1.msra.mxu0 0.0
    %1039 = vmatprep.subr.mxu0 0.0
    %1040 = vmatpush1.msra.mxu0 0.0
    %1041 = vmatprep.subr.mxu0 0.0
    %1042 = vmatpush1.msra.mxu0 0.0
    %1043 = vmatprep.subr.mxu0 0.0
    %1044 = vmatpush1.msra.mxu0 0.0
    %1045 = vmatprep.subr.mxu0 0.0
    %1046 = vmatpush1.msra.mxu0 0.0
    %1047 = vmatprep.subr.mxu0 0.0
    %1048 = vmatpush1.msra.mxu0 0.0
    %1049 = vmatprep.subr.mxu0 0.0
    %1050 = vmatpush1.msra.mxu0 0.0
    %1051 = vmatprep.subr.mxu0 0.0
    %1052 = vmatpush1.msra.mxu0 0.0
    %1053 = vmatprep.subr.mxu0 0.0
    %1054 = vmatpush1.msra.mxu0 0.0
    %1055 = vmatprep.subr.mxu0 0.0
    %1056 = vmatpush1.msra.mxu0 0.0
    %1057 = vmatprep.mubr.f32.mxu0 0.0
    %1058 = vmatmul.mubr.f32.gmra.mrb[0].mxu0 %v988
    %v1059 = vpop.f32.mrb[0].mxu0
    %v1060 = vadd.f32 %v986, %v1059
    %v1061 = vpop.f32.mrb[0].mxu0
    %1062 = vmatprep.mubr.f32.mxu0 0.0
    %1063 = vmatmul.mubr.f32.gmra.mrb[0].mxu0 %v991
    %v1064 = vpop.f32.mrb[0].mxu0
    %v1065 = vadd.f32 %v986, %v1064
    %v1066 = vpop.f32.mrb[0].mxu0
    %1067 = vdwg.mxu0
    %v1068 = vmax.f32 %v1060, 0.0
    %v1069 = vmax.f32 %v1065, 0.0
    %v1070 = vadd.f32 %v981, %v1068
    %v1071 = vadd.f32 %v982, %v1069
    %1072 = vst.msk [vmem:[#allocation2] sm:$0xff] %vm61, %v1070
    %1073 = vst.msk [vmem:[#allocation2 + $0x8] sm:$0xff] %vm61, %v1071
    // Predicated region
    $region26: #{pma_forward.1} parent=1 // pred_check
      _
    $region27: #{pma_forward.1} parent=1 // pred_check_branch
      %1075 = sbr.rel (0) target = $region29
    $region28: #{pma_forward.1} parent=1 // pred_region
      %s1077 = ssub.s32 256, 256
      %1078 = vsyncadd [#allocation3], %s1077
      %s1079 = sshll.u32 [#allocation2], 4
      %s1080 = int_to_ptr.vmem [resolvable:$true] %s1079
      %1085 = dma.vmem_to_hbm [thread:$0]  %s1080, 256, %s6, [#allocation3], 128, 128, 8
    $region29: #{pma_forward.1} parent=1 // pred_fallthru
      _
    // Predicated region
    $region30: #{pma_forward.1} parent=1 // pred_check
      _
    $region31: #{pma_forward.1} parent=1 // pred_check_branch
      %1087 = sbr.rel (0) target = $region33
    $region32: #{pma_forward.1} parent=1 // pred_region
      %1088 = dma.done [#allocation3], 256
    $region33: #{pma_forward.1} parent=1 // pred_fallthru
      _
    %1089 = vsyncpa [#allocation3], 1

</llo_original>
